<compile_context>
chip_gen: v7x
topology: tpu7x:2x2x1
jax: 0.10.0
libtpu: 0.0.40
codegen_flags: <defaults>
</compile_context>

<pallas_src>
import jax
import jax.numpy as jnp
import numpy as np
from jax import lax
from jax.experimental import pallas as pl
from jax.experimental.pallas import tpu as pltpu


def _round_up(x, m):
    return ((x + m - 1) // m) * m


# ----------------------------------------------------------------------------
# Generic tiled GEMM + bias kernel (used for the input->gates and FC phases).
# ----------------------------------------------------------------------------
def matmul_bias_kernel(a_ref, w_ref, b_ref, o_ref):
    # a: [TM, K], w: [K, TN], b: [1, TN] -> o: [TM, TN]
    o_ref[...] = (
        jnp.dot(a_ref[...], w_ref[...], preferred_element_type=jnp.float32)
        + b_ref[...]
    ).astype(o_ref.dtype)


def matmul_bias(a, w, bias):
    """out = a @ w + bias, tiled over M and N (lane-dense, 128-multiple N)."""
    M, K = a.shape
    _, N = w.shape

    # TODO(synk): on v6e/v7x cast a/w to bf16 for the GEMM phases (keep f32 acc).
    # Lane-dense N tiling (pad N to a multiple of 128).
    N_pad = _round_up(N, 128)
    if N_pad > 512:
        TN = 512
        N_pad = _round_up(N_pad, TN)
    else:
        TN = N_pad
    # Sublane-aligned M tiling.
    M_pad = _round_up(M, 8)
    if M_pad > 256:
        TM = 256
        M_pad = _round_up(M_pad, TM)
    else:
        TM = M_pad

    a_p = a if M_pad == M else jnp.pad(a, ((0, M_pad - M), (0, 0)))
    w_p = w if N_pad == N else jnp.pad(w, ((0, 0), (0, N_pad - N)))
    b_p = bias.reshape(1, N)
    b_p = b_p if N_pad == N else jnp.pad(b_p, ((0, 0), (0, N_pad - N)))

    grid = (M_pad // TM, N_pad // TN)
    out = pl.pallas_call(
        matmul_bias_kernel,
        out_shape=jax.ShapeDtypeStruct((M_pad, N_pad), jnp.float32),
        grid=grid,
        in_specs=[
            pl.BlockSpec((TM, K), lambda i, j: (i, 0)),
            pl.BlockSpec((K, TN), lambda i, j: (0, j)),
            pl.BlockSpec((1, TN), lambda i, j: (0, j)),
        ],
        out_specs=pl.BlockSpec((TM, TN), lambda i, j: (i, j)),
        compiler_params=pltpu.CompilerParams(
            dimension_semantics=("parallel", "parallel")),
        cost_estimate=pl.CostEstimate(
            flops=2 * M_pad * K * N_pad,
            transcendentals=0,
            bytes_accessed=4 * (M_pad * K + K * N_pad + M_pad * N_pad)),
    )(a_p, w_p, b_p)
    return out[:M, :N]


# ----------------------------------------------------------------------------
# Serial GRU recurrence: only the h-dependent work stays in the loop.
# ----------------------------------------------------------------------------
def gru_recurrence_kernel(gi_ref, whh_ref, bhn_ref, hall_ref):
    """
    gi_ref  : [S, B, 3H]  precomputed x@Wih (+ folded r/z biases, + b_in)
    whh_ref : [H, 3H]     fused hidden-to-hidden weight (gate order r, z, n)
    bhn_ref : [1, H]      hidden bias of the n gate (kept separate: gated by r)
    hall_ref: [S, B, H]   all hidden states
    """
    S, B, _ = gi_ref.shape
    H = whh_ref.shape[0]

    def step(t, h):
        gi = gi_ref[t]                                               # [B, 3H]
        gh = jnp.dot(h, whh_ref[...], preferred_element_type=jnp.float32)  # [B, 3H]
        r = jax.nn.sigmoid(gi[:, 0:H] + gh[:, 0:H])
        z = jax.nn.sigmoid(gi[:, H:2 * H] + gh[:, H:2 * H])
        n = jnp.tanh(gi[:, 2 * H:3 * H] + r * (gh[:, 2 * H:3 * H] + bhn_ref[...]))
        h_new = (1.0 - z) * n + z * h
        hall_ref[t] = h_new
        return h_new

    h0 = jnp.zeros((B, H), jnp.float32)
    # h lives in the loop carry (vregs), not VMEM; modest unroll lets the LLO
    # scheduler overlap step t+1's MXU push with step t's EUP/VPU tail.
    lax.fori_loop(0, S, step, h0, unroll=min(S, 8))


# ----------------------------------------------------------------------------
# Parameter handling + forward wrapper
# ----------------------------------------------------------------------------
def fuse_params(params):
    """Fold per-gate GRU weights/biases into the fused layouts the kernels use."""
    wih, whh = params["wih"], params["whh"]        # [3, E, H], [3, H, H]
    bih, bhh = params["bih"], params["bhh"]        # [3, 1, H], [3, 1, H]
    wih_cat = jnp.concatenate([wih[0], wih[1], wih[2]], axis=1)   # [E, 3H]
    whh_cat = jnp.concatenate([whh[0], whh[1], whh[2]], axis=1)   # [H, 3H]
    # r/z biases: bih + bhh fold into the precomputed GI; n keeps bhh_n separate.
    bi_fold = jnp.concatenate([bih[0] + bhh[0], bih[1] + bhh[1], bih[2]], axis=1)  # [1, 3H]
    return dict(embedding=params["embedding"], wih_cat=wih_cat, whh_cat=whh_cat,
                bi_fold=bi_fold, bhh_n=bhh[2], wfc=params["wfc"], bfc=params["bfc"])


def language_model_forward(text, fused):
    """text: [B, S] int32 token ids. Returns logits [B, S, V] (float32)."""
    # Embedding gather fused with the time-major transpose (single gather).
    x_tm = jnp.take(fused["embedding"], text.T, axis=0).astype(jnp.float32)  # [S, B, E]
    S, B, E = x_tm.shape
    H = fused["whh_cat"].shape[0]
    V = fused["wfc"].shape[1]

    # Phase 1: batched input->gates GEMM (off the serial critical path).
    gi = matmul_bias(x_tm.reshape(S * B, E), fused["wih_cat"], fused["bi_fold"])
    gi = gi.reshape(S, B, 3 * H)

    # Phase 2: serial recurrence producing hidden states only.
    # TODO(synk): for very long S, tile this over an 'arbitrary' S grid axis
    #             (carry h in scratch) to bound VMEM on v7x's 64 MiB.
    h_all = pl.pallas_call(
        gru_recurrence_kernel,
        out_shape=jax.ShapeDtypeStruct((S, B, H), jnp.float32),
        grid=(1,),
        in_specs=[
            pl.BlockSpec((S, B, 3 * H), lambda i: (0, 0, 0)),
            pl.BlockSpec((H, 3 * H), lambda i: (0, 0)),
            pl.BlockSpec((1, H), lambda i: (0, 0)),
        ],
        out_specs=pl.BlockSpec((S, B, H), lambda i: (0, 0, 0)),
        compiler_params=pltpu.CompilerParams(
            dimension_semantics=("arbitrary",)),
    )(gi, fused["whh_cat"], fused["bhh_n"])

    # Phase 3: batched, tiled vocab projection (lane-dense, megacore-parallel).
    logits_flat = matmul_bias(h_all.reshape(S * B, H), fused["wfc"], fused["bfc"])
    return jnp.transpose(logits_flat.reshape(S, B, V), (1, 0, 2))   # [B, S, V]


def init_params(key, vocab_size, embedding_dim, hidden_dim):
    """Deterministic parameter init mirroring nn.Embedding / nn.GRU / nn.Linear shapes."""
    ks = jax.random.split(key, 7)
    k = 1.0 / np.sqrt(hidden_dim)
    emb = jax.random.normal(ks[0], (vocab_size, embedding_dim), jnp.float32)
    # PyTorch stores weight_ih_l0 as [3H, E]; here already transposed and split per gate (r, z, n).
    wih = jax.random.uniform(ks[1], (3, embedding_dim, hidden_dim), jnp.float32, -k, k)
    whh = jax.random.uniform(ks[2], (3, hidden_dim, hidden_dim), jnp.float32, -k, k)
    bih = jax.random.uniform(ks[3], (3, 1, hidden_dim), jnp.float32, -k, k)
    bhh = jax.random.uniform(ks[4], (3, 1, hidden_dim), jnp.float32, -k, k)
    wfc = jax.random.uniform(ks[5], (hidden_dim, vocab_size), jnp.float32, -k, k)
    bfc = jax.random.uniform(ks[6], (1, vocab_size), jnp.float32, -k, k)
    return dict(embedding=emb, wih=wih, whh=whh, bih=bih, bhh=bhh, wfc=wfc, bfc=bfc)


def reference_forward(text, params):
    """Pure-JAX reference (PyTorch GRU math, per-gate) for a correctness check."""
    emb = jnp.take(params["embedding"], text, axis=0)
    B, S, E = emb.shape
    H = params["whh"].shape[-1]
    x_tm = jnp.transpose(emb, (1, 0, 2))

    def step(h, x_t):
        gi = [x_t @ params["wih"][g] + params["bih"][g] for g in range(3)]
        gh = [h @ params["whh"][g] + params["bhh"][g] for g in range(3)]
        r = jax.nn.sigmoid(gi[0] + gh[0])
        z = jax.nn.sigmoid(gi[1] + gh[1])
        n = jnp.tanh(gi[2] + r * gh[2])
        h_new = (1.0 - z) * n + z * h
        return h_new, h_new

    h0 = jnp.zeros((B, H), jnp.float32)
    _, hs = lax.scan(step, h0, x_tm)                          # [S, B, H]
    logits = hs @ params["wfc"] + params["bfc"]               # [S, B, V]
    return jnp.transpose(logits, (1, 0, 2))


if __name__ == "__main__":
    vocab_size, embedding_dim, hidden_dim = 64, 32, 32
    B, S = 2, 8

    key = jax.random.PRNGKey(0)
    pkey, tkey = jax.random.split(key)
    params = init_params(pkey, vocab_size, embedding_dim, hidden_dim)
    fused = fuse_params(params)
    text = jax.random.randint(tkey, (B, S), 0, vocab_size, dtype=jnp.int32)

    logits = jax.block_until_ready(language_model_forward(text, fused))
    ref = jax.block_until_ready(reference_forward(text, params))

    assert logits.shape == (B, S, vocab_size), logits.shape
    np.testing.assert_allclose(np.asarray(logits), np.asarray(ref), rtol=2e-5, atol=2e-5)
    print("KERNEL_OK")
</pallas_src>

<mosaic_0001>
module attributes {stable_mosaic.version = 11 : i64} {
  func.func @matmul_bias_kernel(%arg0: i32, %arg1: i32, %arg2: memref<16x32xf32, #tpu.memory_space<vmem>>, %arg3: memref<32x128xf32, #tpu.memory_space<vmem>>, %arg4: memref<1x128xf32, #tpu.memory_space<vmem>>, %arg5: memref<16x128xf32, #tpu.memory_space<vmem>>) attributes {dimension_semantics = [#tpu.dimension_semantics<parallel>, #tpu.dimension_semantics<parallel>], iteration_bounds = array<i64: 1, 1>, scalar_prefetch = 0 : i64, scratch_operands = 0 : i64, tpu.core_type = #tpu.core_type<tc>, window_params = [{transform_indices = @transform_0, window_bounds = array<i64: 16, 32>}, {transform_indices = @transform_1, window_bounds = array<i64: 32, 128>}, {transform_indices = @transform_2, window_bounds = array<i64: 1, 128>}, {transform_indices = @transform_3, window_bounds = array<i64: 16, 128>}]} {
    %c0 = arith.constant 0 : index
    %c0_0 = arith.constant 0 : index
    %0 = vector.load %arg2[%c0, %c0_0] : memref<16x32xf32, #tpu.memory_space<vmem>>, vector<16x32xf32>
    %c0_1 = arith.constant 0 : index
    %c0_2 = arith.constant 0 : index
    %1 = vector.load %arg3[%c0_1, %c0_2] : memref<32x128xf32, #tpu.memory_space<vmem>>, vector<32x128xf32>
    %cst = arith.constant dense<0.000000e+00> : vector<16x128xf32>
    %2 = tpu.matmul %0, %1, %cst {dimension_numbers = #tpu.dot_dimension_numbers<[1], [0], [0], [1], [0, 0, 1, 1], [], []>} : vector<16x32xf32>, vector<32x128xf32>, vector<16x128xf32> -> vector<16x128xf32>
    %c0_3 = arith.constant 0 : index
    %c0_4 = arith.constant 0 : index
    %3 = vector.load %arg4[%c0_3, %c0_4] : memref<1x128xf32, #tpu.memory_space<vmem>>, vector<1x128xf32>
    %4 = vector.broadcast %3 : vector<1x128xf32> to vector<16x128xf32>
    %5 = arith.addf %2, %4 : vector<16x128xf32>
    %c0_5 = arith.constant 0 : index
    %c0_6 = arith.constant 0 : index
    %6 = vector.load %arg5[%c0_5, %c0_6] : memref<16x128xf32, #tpu.memory_space<vmem>>, vector<16x128xf32>
    tpu.vector_store %arg5[%c0_5, %c0_6], %5 {strides = array<i32>} : memref<16x128xf32, #tpu.memory_space<vmem>>, vector<16x128xf32>,
    return
  }
  func.func @transform_0(%arg0: i32, %arg1: i32) -> (i32, i32) {
    %c0_i32 = arith.constant 0 : i32
    %c0_i32_0 = arith.constant 0 : i32
    return %arg0, %c0_i32 : i32, i32
  }
  func.func @transform_1(%arg0: i32, %arg1: i32) -> (i32, i32) {
    %c0_i32 = arith.constant 0 : i32
    %c0_i32_0 = arith.constant 0 : i32
    return %c0_i32, %arg1 : i32, i32
  }
  func.func @transform_2(%arg0: i32, %arg1: i32) -> (i32, i32) {
    %c0_i32 = arith.constant 0 : i32
    %c0_i32_0 = arith.constant 0 : i32
    return %c0_i32, %arg1 : i32, i32
  }
  func.func @transform_3(%arg0: i32, %arg1: i32) -> (i32, i32) {
    %c0_i32 = arith.constant 0 : i32
    return %arg0, %arg1 : i32, i32
  }
}

</mosaic_0001>

<llo_original>
// kernel: tpu_custom_call.1
$region0: #{tpu_custom_call.1}
  #allocation0 [shape = 'u32[]', space=smem, size = 0x4, offset = 0x4, fixed_abs, tag = 'smem constant byte address 0x4 - core index']
  #allocation1 [shape = 'u32[144,128]{1,0:T(1,128)}', space=vmem, size = 0x12000, scoped, tag = 'internal scratch']
  %s0 = inlined_call_operand.hbm [shape: f32[16,32], index: 0, kind: input, shape index: {}]
  %s1 = inlined_call_operand.hbm [shape: f32[32,128], index: 1, kind: input, shape index: {}]
  %s2 = inlined_call_operand.vmem [shape: f32[1,128], index: 2, kind: input, shape index: {}]
  %s3 = inlined_call_operand.hbm [shape: f32[16,128], index: 3, kind: output, shape index: {}]
  %s4 = sld [smem:[#allocation0]]
  $region30: #{tpu_custom_call.1} parent=0
    _
  %s6 = ssub.s32 1, %s4
  %s7 = scalar_select 0, %s6, %s4
  $region1: #{tpu_custom_call.1} parent=0
    #allocation2 [shape = 'u8[8192]{0}', space=vmem, size = 0x2000, scoped, tag = 'input window, operand 0, single buffered']
    #allocation3 [shape = 's32[1]{0}', space=sflag, size = 0x4, scoped, tag = 'scoped memory for tpu_custom_call.1']
    #allocation4 [shape = 's32[1]{0}', space=sflag, size = 0x4, scoped, tag = 'scoped memory for tpu_custom_call.1']
    #allocation5 [shape = 'u8[16384]{0}', space=vmem, size = 0x4000, scoped, tag = 'input window, operand 1, single buffered']
    #allocation6 [shape = 's32[1]{0}', space=sflag, size = 0x4, scoped, tag = 'scoped memory for tpu_custom_call.1']
    #allocation7 [shape = 'u8[8192]{0}', space=vmem, size = 0x2000, scoped, tag = 'output window, operand 0, single buffered']
    %8 = vsyncpa [#allocation3], 0
    %9 = vsyncpa [#allocation6], 0
    %10 = vsyncpa [#allocation4], 0
    // Predicated region
    $region2: #{tpu_custom_call.1} parent=1 // pred_check
      _
    $region3: #{tpu_custom_call.1} parent=1 // pred_check_branch
      %12 = sbr.rel (0) target = $region5
    $region4: #{tpu_custom_call.1} parent=1 // pred_region
      %s14 = ssub.s32 256, 256
      %15 = vsyncadd [#allocation3], %s14
      %s16 = sshll.u32 [#allocation2], 4
      %s17 = int_to_ptr.vmem [resolvable:$true] %s16
      %22 = dma.hbm_to_vmem [thread:$0]  %s0, 256, %s17, [#allocation3], 128, 128, 8
    $region5: #{tpu_custom_call.1} parent=1 // pred_fallthru
      _
    // Predicated region
    $region6: #{tpu_custom_call.1} parent=1 // pred_check
      _
    $region7: #{tpu_custom_call.1} parent=1 // pred_check_branch
      %24 = sbr.rel (0) target = $region9
    $region8: #{tpu_custom_call.1} parent=1 // pred_region
      %s26 = ssub.s32 512, 512
      %27 = vsyncadd [#allocation6], %s26
      %s28 = sshll.u32 [#allocation5], 4
      %s29 = int_to_ptr.vmem [resolvable:$true] %s28
      %34 = dma.hbm_to_vmem [thread:$0]  %s1, 512, %s29, [#allocation6], 128, 128, 8
    $region9: #{tpu_custom_call.1} parent=1 // pred_fallthru
      _
    // Predicated region
    $region10: #{tpu_custom_call.1} parent=1 // pred_check
      _
    $region11: #{tpu_custom_call.1} parent=1 // pred_check_branch
      %36 = sbr.rel (0) target = $region13
    $region12: #{tpu_custom_call.1} parent=1 // pred_region
      _
    $region13: #{tpu_custom_call.1} parent=1 // pred_fallthru
      _
    // Predicated region
    $region14: #{tpu_custom_call.1} parent=1 // pred_check
      _
    $region15: #{tpu_custom_call.1} parent=1 // pred_check_branch
      %38 = sbr.rel (0) target = $region17
    $region16: #{tpu_custom_call.1} parent=1 // pred_region
      %39 = dma.done [#allocation3], 256
    $region17: #{tpu_custom_call.1} parent=1 // pred_fallthru
      _
    // Predicated region
    $region18: #{tpu_custom_call.1} parent=1 // pred_check
      _
    $region19: #{tpu_custom_call.1} parent=1 // pred_check_branch
      %41 = sbr.rel (0) target = $region21
    $region20: #{tpu_custom_call.1} parent=1 // pred_region
      %42 = dma.done [#allocation6], 512
    $region21: #{tpu_custom_call.1} parent=1 // pred_fallthru
      _
    %v43 = vld [vmem:[#allocation2] sm:$0xff]
    %v44 = vld [vmem:[#allocation2 + $0x8] sm:$0xff]
    %v45 = vld [vmem:[#allocation5] sm:$0xff]
    %v46 = vld [vmem:[#allocation5 + $0x8] sm:$0xff]
    %v47 = vld [vmem:[#allocation5 + $0x10] sm:$0xff]
    %v48 = vld [vmem:[#allocation5 + $0x18] sm:$0xff]
    %v49 = vld [vmem:[%s2] sm:$0x1]
    %v51 = vlaneseq
    %v52 = vshrl.u32 %v51, 7
    %v53 = vsub.s32 0, %v52
    %v54 = vrot.slane %v49, %v53
    %vm56 = vcmask 261120
    %v58 = vsel %vm56, %v43, 0
    %v61 = vsel %vm56, %v44, 0
    %63 = vmatprep.subr.mxu0 0.0
    %64 = vmatpush1.msra.mxu0 %v45
    %65 = vmatprep.subr.mxu0 0.0
    %66 = vmatpush1.msra.mxu0 %v46
    %67 = vmatprep.subr.mxu0 0.0
    %68 = vmatpush1.msra.mxu0 %v47
    %69 = vmatprep.subr.mxu0 0.0
    %70 = vmatpush1.msra.mxu0 %v48
    %71 = vmatprep.subr.mxu0 0.0
    %72 = vmatpush1.msra.mxu0 0.0
    %73 = vmatprep.subr.mxu0 0.0
    %74 = vmatpush1.msra.mxu0 0.0
    %75 = vmatprep.subr.mxu0 0.0
    %76 = vmatpush1.msra.mxu0 0.0
    %77 = vmatprep.subr.mxu0 0.0
    %78 = vmatpush1.msra.mxu0 0.0
    %79 = vmatprep.subr.mxu0 0.0
    %80 = vmatpush1.msra.mxu0 0.0
    %81 = vmatprep.subr.mxu0 0.0
    %82 = vmatpush1.msra.mxu0 0.0
    %83 = vmatprep.subr.mxu0 0.0
    %84 = vmatpush1.msra.mxu0 0.0
    %85 = vmatprep.subr.mxu0 0.0
    %86 = vmatpush1.msra.mxu0 0.0
    %87 = vmatprep.subr.mxu0 0.0
    %88 = vmatpush1.msra.mxu0 0.0
    %89 = vmatprep.subr.mxu0 0.0
    %90 = vmatpush1.msra.mxu0 0.0
    %91 = vmatprep.subr.mxu0 0.0
    %92 = vmatpush1.msra.mxu0 0.0
    %93 = vmatprep.subr.mxu0 0.0
    %94 = vmatpush1.msra.mxu0 0.0
    %95 = vmatprep.subr.mxu0 0.0
    %96 = vmatpush1.msra.mxu0 0.0
    %97 = vmatprep.subr.mxu0 0.0
    %98 = vmatpush1.msra.mxu0 0.0
    %99 = vmatprep.subr.mxu0 0.0
    %100 = vmatpush1.msra.mxu0 0.0
    %101 = vmatprep.subr.mxu0 0.0
    %102 = vmatpush1.msra.mxu0 0.0
    %103 = vmatprep.subr.mxu0 0.0
    %104 = vmatpush1.msra.mxu0 0.0
    %105 = vmatprep.subr.mxu0 0.0
    %106 = vmatpush1.msra.mxu0 0.0
    %107 = vmatprep.subr.mxu0 0.0
    %108 = vmatpush1.msra.mxu0 0.0
    %109 = vmatprep.subr.mxu0 0.0
    %110 = vmatpush1.msra.mxu0 0.0
    %111 = vmatprep.subr.mxu0 0.0
    %112 = vmatpush1.msra.mxu0 0.0
    %113 = vmatprep.subr.mxu0 0.0
    %114 = vmatpush1.msra.mxu0 0.0
    %115 = vmatprep.subr.mxu0 0.0
    %116 = vmatpush1.msra.mxu0 0.0
    %117 = vmatprep.subr.mxu0 0.0
    %118 = vmatpush1.msra.mxu0 0.0
    %119 = vmatprep.subr.mxu0 0.0
    %120 = vmatpush1.msra.mxu0 0.0
    %121 = vmatprep.subr.mxu0 0.0
    %122 = vmatpush1.msra.mxu0 0.0
    %123 = vmatprep.subr.mxu0 0.0
    %124 = vmatpush1.msra.mxu0 0.0
    %125 = vmatprep.subr.mxu0 0.0
    %126 = vmatpush1.msra.mxu0 0.0
    %127 = vmatprep.mubr.f32.mxu0 0.0
    %128 = vmatmul.mubr.f32.gmra.mrb[0].mxu0 %v58
    %v129 = vpop.f32.mrb[0].mxu0
    %v130 = vadd.f32 %v54, %v129
    %v131 = vpop.f32.mrb[0].mxu0
    %132 = vmatprep.mubr.f32.mxu0 0.0
    %133 = vmatmul.mubr.f32.gmra.mrb[0].mxu0 %v61
    %v134 = vpop.f32.mrb[0].mxu0
    %v135 = vadd.f32 %v54, %v134
    %v136 = vpop.f32.mrb[0].mxu0
    %137 = vdwg.mxu0
    %138 = vst [vmem:[#allocation7] sm:$0xff] %v130
    %139 = vst [vmem:[#allocation7 + $0x8] sm:$0xff] %v135
    // Predicated region
    $region22: #{tpu_custom_call.1} parent=1 // pred_check
      _
    $region23: #{tpu_custom_call.1} parent=1 // pred_check_branch
      %141 = sbr.rel (0) target = $region25
    $region24: #{tpu_custom_call.1} parent=1 // pred_region
      %s143 = ssub.s32 256, 256
      %144 = vsyncadd [#allocation4], %s143
      %s145 = sshll.u32 [#allocation7], 4
      %s146 = int_to_ptr.vmem [resolvable:$true] %s145
      %151 = dma.vmem_to_hbm [thread:$0]  %s146, 256, %s3, [#allocation4], 128, 128, 8
    $region25: #{tpu_custom_call.1} parent=1 // pred_fallthru
      _
    // Predicated region
    $region26: #{tpu_custom_call.1} parent=1 // pred_check
      _
    $region27: #{tpu_custom_call.1} parent=1 // pred_check_branch
      %153 = sbr.rel (0) target = $region29
    $region28: #{tpu_custom_call.1} parent=1 // pred_region
      %154 = dma.done [#allocation4], 256
    $region29: #{tpu_custom_call.1} parent=1 // pred_fallthru
      _
    %155 = vsyncpa [#allocation3], 1
    %156 = vsyncpa [#allocation6], 1
    %157 = vsyncpa [#allocation4], 1

</llo_original>
